<compile_context>
chip_gen: v7x
topology: tpu7x:2x2x1
jax: 0.10.0
libtpu: 0.0.40
codegen_flags: <defaults>
</compile_context>

<pallas_src>
import math

import jax
import jax.numpy as jnp
from jax.experimental import pallas as pl
from jax.experimental.pallas import tpu as pltpu


def _pair(v):
    if isinstance(v, (tuple, list)):
        return tuple(v)
    return (v, v)


def _round_up(x, m):
    return ((x + m - 1) // m) * m


# ----------------------------- Pallas kernel ------------------------------ #

def _conv_mm_kernel(p_ref, w_ref, b_ref, o_ref, acc_ref):
    """One (tm x tk) @ (tk x O_pad) step of the K-tiled, bias-fused matmul."""
    k = pl.program_id(1)

    @pl.when(k == 0)
    def _init():
        acc_ref[...] = jnp.zeros_like(acc_ref)

    acc_ref[...] += jnp.dot(p_ref[...], w_ref[...],
                            preferred_element_type=jnp.float32)

    @pl.when(k == pl.num_programs(1) - 1)
    def _finalize():
        o_ref[...] = (acc_ref[...] + b_ref[...]).astype(o_ref.dtype)


def _pick_tiles(M, K, O_pad, in_itemsize, out_itemsize,
                budget_bytes=36 * 1024 * 1024, tm_max=512):
    """Choose (tm, tk, K_pad) so double-buffered tiles fit a VMEM budget."""
    if K <= 2048:
        tk, K_pad = K, K                       # single K step, no K padding
    else:
        tk = 512                               # lane-aligned K tiles
        K_pad = _round_up(K, tk)

    def vmem_need(tm_):
        return (2 * tm_ * tk * in_itemsize       # patches tile (double-buffered)
                + 2 * tk * O_pad * in_itemsize   # weight tile (double-buffered)
                + 2 * O_pad * 4                  # bias
                + 2 * tm_ * O_pad * out_itemsize  # output tile (double-buffered)
                + tm_ * O_pad * 4)               # f32 accumulator scratch

    tm = tm_max
    while tm > 8 and vmem_need(tm) > budget_bytes:
        tm //= 2
    tm = max(8, min(tm, _round_up(M, 8)))        # don't wildly over-pad small M
    return tm, tk, K_pad, vmem_need(tm)


def _matmul_bias_pallas(patches, w_mat, bias_row, out_dtype):
    """patches [M, K] @ w_mat [K, O_pad] + bias_row [1, O_pad] -> [M, O_pad]."""
    M, K = patches.shape
    O_pad = w_mat.shape[1]
    in_itemsize = patches.dtype.itemsize
    out_itemsize = jnp.dtype(out_dtype).itemsize
    tm, tk, K_pad, vmem_need = _pick_tiles(M, K, O_pad, in_itemsize, out_itemsize)

    Mp = _round_up(M, tm)
    if Mp != M or K_pad != K:
        patches = jnp.pad(patches, ((0, Mp - M), (0, K_pad - K)))
    if K_pad != K:
        w_mat = jnp.pad(w_mat, ((0, K_pad - K), (0, 0)))

    m_tiles = Mp // tm
    k_tiles = K_pad // tk

    out = pl.pallas_call(
        _conv_mm_kernel,
        out_shape=jax.ShapeDtypeStruct((Mp, O_pad), out_dtype),
        grid_spec=pltpu.PrefetchScalarGridSpec(
            num_scalar_prefetch=0,
            grid=(m_tiles, k_tiles),
            in_specs=[
                pl.BlockSpec((tm, tk), lambda i, k: (i, k)),      # patches tile
                # TODO(synk): single-buffer the constant-index weight/bias via
                # pipeline_mode=pl.Buffered(1) once verified on the target jax.
                pl.BlockSpec((tk, O_pad), lambda i, k: (k, 0)),   # weight slab
                pl.BlockSpec((1, O_pad), lambda i, k: (0, 0)),    # bias row
            ],
            out_specs=pl.BlockSpec((tm, O_pad), lambda i, k: (i, 0)),
            scratch_shapes=[pltpu.VMEM((tm, O_pad), jnp.float32)],
        ),
        compiler_params=pltpu.CompilerParams(
            dimension_semantics=("parallel", "arbitrary"),
            vmem_limit_bytes=int(min(max(vmem_need + (8 << 20), 32 << 20),
                                     56 << 20)),
        ),
    )(patches, w_mat, bias_row)
    return out[:M]


# --------------------------- Conv2d forward pass --------------------------- #

def conv2d_same_padding(x, weight, bias=None, stride=(1, 1), padding=(1, 1),
                        dilation=(1, 1), groups=1, compute_dtype=None):
    """Reproduces secure_ml conv2d_same_padding semantics (NCHW input)."""
    # TODO(synk): grouped convolution (groups > 1) not implemented.
    assert groups == 1, "groups != 1 not supported"
    sh, sw = stride
    dh, dw = dilation
    N, C, H, W = x.shape
    O, _, KH, KW = weight.shape

    # --- exact replica of the reference padding computation (incl. its use
    # --- of the ROW geometry for the column padding; `padding` arg ignored) ---
    out_rows = (H + sh - 1) // sh
    padding_rows = max(0, (out_rows - 1) * sh + (KH - 1) * dh + 1 - H)
    rows_odd = (padding_rows % 2) != 0
    padding_cols = max(0, (out_rows - 1) * sh + (KH - 1) * dh + 1 - H)
    cols_odd = (padding_rows % 2) != 0
    pad_h = padding_rows // 2
    pad_w = padding_cols // 2

    # Work in NHWC so im2col patches are lane-contiguous along C and no
    # transpose of the KH*KW-inflated tensor is required.
    xh = jnp.transpose(x, (0, 2, 3, 1))                     # [N, H, W, C]
    # odd padding goes on bottom/right (F.pad [0, cols_odd, 0, rows_odd]),
    # symmetric (pad_h, pad_w) padding everywhere else — combined in one pad.
    xh = jnp.pad(xh, ((0, 0),
                      (pad_h, pad_h + int(rows_odd)),
                      (pad_w, pad_w + int(cols_odd)),
                      (0, 0)))
    _, Hp, Wp, _ = xh.shape
    OH = (Hp - dh * (KH - 1) - 1) // sh + 1
    OW = (Wp - dw * (KW - 1) - 1) // sw + 1

    # --- im2col: K ordered (kh, kw, C), C innermost ---
    cols = []
    for kh in range(KH):
        for kw in range(KW):
            h0, w0 = kh * dh, kw * dw
            cols.append(xh[:, h0:h0 + (OH - 1) * sh + 1:sh,
                               w0:w0 + (OW - 1) * sw + 1:sw, :])   # [N,OH,OW,C]
    patches = jnp.concatenate(cols, axis=-1)                # [N, OH, OW, KH*KW*C]
    patches = patches.reshape(N * OH * OW, KH * KW * C)

    # weight [O, C, KH, KW] -> [KH, KW, C, O] -> [K, O] (matches K ordering)
    w_mat = jnp.transpose(weight, (2, 3, 1, 0)).reshape(KH * KW * C, O)

    # lane-dense output: pad O up to a multiple of 128, slice afterwards
    O_pad = _round_up(O, 128)
    if O_pad != O:
        w_mat = jnp.pad(w_mat, ((0, 0), (0, O_pad - O)))
    if bias is None:
        bias_row = jnp.zeros((1, O_pad), jnp.float32)
    else:
        bias_row = jnp.pad(bias.astype(jnp.float32).reshape(1, O),
                           ((0, 0), (0, O_pad - O)))

    mm_dtype = compute_dtype if compute_dtype is not None else x.dtype
    patches = patches.astype(mm_dtype)
    w_mat = w_mat.astype(mm_dtype)

    out = _matmul_bias_pallas(patches, w_mat, bias_row, out_dtype=x.dtype)
    out = out[:, :O].reshape(N, OH, OW, O)                  # [N, OH, OW, O]
    return jnp.transpose(out, (0, 3, 1, 2))                 # NCHW


class Conv2d:
    """JAX/Pallas analogue of the secure_ml Conv2d module."""

    def __init__(self, in_channels, out_channels, kernel_size, stride=1,
                 padding=0, dilation=1, groups=1, bias=True, *, key):
        self.in_channels = in_channels
        self.out_channels = out_channels
        self.kernel_size = _pair(kernel_size)
        self.stride = _pair(stride)
        self.padding = _pair(padding)      # note: ignored by forward, as in ref
        self.dilation = _pair(dilation)
        self.groups = groups
        if in_channels % groups != 0 or out_channels % groups != 0:
            raise ValueError("channels must be divisible by groups")

        # reset_parameters(): uniform(-stdv, stdv), stdv = 1/sqrt(C*KH*KW)
        n = in_channels * self.kernel_size[0] * self.kernel_size[1]
        stdv = 1.0 / math.sqrt(n)
        k_w, k_b = jax.random.split(key)
        self.weight = jax.random.uniform(
            k_w,
            (out_channels, in_channels // groups, *self.kernel_size),
            jnp.float32, minval=-stdv, maxval=stdv)
        self.bias = (jax.random.uniform(k_b, (out_channels,), jnp.float32,
                                        minval=-stdv, maxval=stdv)
                     if bias else None)

    def __call__(self, x):
        return conv2d_same_padding(x, self.weight, self.bias, self.stride,
                                   self.padding, self.dilation, self.groups)


# ---------------------------------- main ----------------------------------- #

if __name__ == "__main__":
    key = jax.random.PRNGKey(0)
    k_x, k_conv = jax.random.split(key)

    N, C, H, W = 2, 4, 16, 16
    O, K = 8, 3
    x = jax.random.normal(k_x, (N, C, H, W), dtype=jnp.float32)

    conv = Conv2d(C, O, kernel_size=K, stride=1, padding=1, bias=True, key=k_conv)
    out = conv(x)
    out = jax.block_until_ready(out)

    # sanity check against XLA's conv (same effective "same" padding for this
    # config: 16x16 input, 3x3 kernel, stride 1, dilation 1 -> pad (1,1))
    ref = jax.lax.conv_general_dilated(
        x, conv.weight, window_strides=(1, 1), padding=((1, 1), (1, 1)),
        dimension_numbers=("NCHW", "OIHW", "NCHW"))
    ref = ref + conv.bias[None, :, None, None]

    assert out.shape == (N, O, H, W), out.shape
    assert jnp.allclose(out, ref, atol=2e-4, rtol=2e-4), \
        float(jnp.max(jnp.abs(out - ref)))
    print("KERNEL_OK")
</pallas_src>

<mosaic_0001>
module attributes {stable_mosaic.version = 11 : i64} {
  func.func @_conv_mm_kernel(%arg0: i32, %arg1: i32, %arg2: memref<512x36xf32, #tpu.memory_space<vmem>>, %arg3: memref<36x128xf32, #tpu.memory_space<vmem>>, %arg4: memref<1x128xf32, #tpu.memory_space<vmem>>, %arg5: memref<512x128xf32, #tpu.memory_space<vmem>>, %arg6: memref<512x128xf32, #tpu.memory_space<vmem>>) attributes {dimension_semantics = [#tpu.dimension_semantics<parallel>, #tpu.dimension_semantics<arbitrary>], iteration_bounds = array<i64: 1, 1>, scalar_prefetch = 0 : i64, scratch_operands = 1 : i64, tpu.core_type = #tpu.core_type<tc>, window_params = [{transform_indices = @transform_0, window_bounds = array<i64: 512, 36>}, {transform_indices = @transform_1, window_bounds = array<i64: 36, 128>}, {pipeline_mode = #tpu.pipeline_mode<synchronous>, transform_indices = @transform_2, window_bounds = array<i64: 1, 128>}, {transform_indices = @transform_3, window_bounds = array<i64: 512, 128>}]} {
    %c0_i32 = arith.constant 0 : i32
    %0 = arith.cmpi eq, %arg1, %c0_i32 : i32
    %1 = arith.extui %0 : i1 to i32
    %c0_i32_0 = arith.constant 0 : i32
    %2 = arith.cmpi ne, %1, %c0_i32_0 : i32
    scf.if %2 {
      %cst_10 = arith.constant 0.000000e+00 : f32
      %12 = vector.broadcast %cst_10 : f32 to vector<512x128xf32>
      %c0_11 = arith.constant 0 : index
      %c0_12 = arith.constant 0 : index
      %13 = vector.load %arg6[%c0_11, %c0_12] : memref<512x128xf32, #tpu.memory_space<vmem>>, vector<512x128xf32>
      tpu.vector_store %arg6[%c0_11, %c0_12], %12 {strides = array<i32>} : memref<512x128xf32, #tpu.memory_space<vmem>>, vector<512x128xf32>,
    } else {
    }
    %c0 = arith.constant 0 : index
    %c0_1 = arith.constant 0 : index
    %3 = vector.load %arg6[%c0, %c0_1] : memref<512x128xf32, #tpu.memory_space<vmem>>, vector<512x128xf32>
    %c0_2 = arith.constant 0 : index
    %c0_3 = arith.constant 0 : index
    %4 = vector.load %arg2[%c0_2, %c0_3] : memref<512x36xf32, #tpu.memory_space<vmem>>, vector<512x36xf32>
    %c0_4 = arith.constant 0 : index
    %c0_5 = arith.constant 0 : index
    %5 = vector.load %arg3[%c0_4, %c0_5] : memref<36x128xf32, #tpu.memory_space<vmem>>, vector<36x128xf32>
    %cst = arith.constant dense<0.000000e+00> : vector<512x128xf32>
    %6 = tpu.matmul %4, %5, %cst {dimension_numbers = #tpu.dot_dimension_numbers<[1], [0], [0], [1], [0, 0, 1, 1], [], []>} : vector<512x36xf32>, vector<36x128xf32>, vector<512x128xf32> -> vector<512x128xf32>
    %7 = arith.addf %3, %6 : vector<512x128xf32>
    %c0_6 = arith.constant 0 : index
    %c0_7 = arith.constant 0 : index
    %8 = vector.load %arg6[%c0_6, %c0_7] : memref<512x128xf32, #tpu.memory_space<vmem>>, vector<512x128xf32>
    tpu.vector_store %arg6[%c0_6, %c0_7], %7 {strides = array<i32>} : memref<512x128xf32, #tpu.memory_space<vmem>>, vector<512x128xf32>,
    %c0_i32_8 = arith.constant 0 : i32
    %9 = arith.cmpi eq, %arg1, %c0_i32_8 : i32
    %10 = arith.extui %9 : i1 to i32
    %c0_i32_9 = arith.constant 0 : i32
    %11 = arith.cmpi ne, %10, %c0_i32_9 : i32
    scf.if %11 {
      %c0_10 = arith.constant 0 : index
      %c0_11 = arith.constant 0 : index
      %12 = vector.load %arg6[%c0_10, %c0_11] : memref<512x128xf32, #tpu.memory_space<vmem>>, vector<512x128xf32>
      %c0_12 = arith.constant 0 : index
      %c0_13 = arith.constant 0 : index
      %13 = vector.load %arg4[%c0_12, %c0_13] : memref<1x128xf32, #tpu.memory_space<vmem>>, vector<1x128xf32>
      %14 = vector.broadcast %13 : vector<1x128xf32> to vector<512x128xf32>
      %15 = arith.addf %12, %14 : vector<512x128xf32>
      %c0_14 = arith.constant 0 : index
      %c0_15 = arith.constant 0 : index
      %16 = vector.load %arg5[%c0_14, %c0_15] : memref<512x128xf32, #tpu.memory_space<vmem>>, vector<512x128xf32>
      tpu.vector_store %arg5[%c0_14, %c0_15], %15 {strides = array<i32>} : memref<512x128xf32, #tpu.memory_space<vmem>>, vector<512x128xf32>,
    } else {
    }
    return
  }
  func.func @transform_0(%arg0: i32, %arg1: i32) -> (i32, i32) {
    %c0_i32 = arith.constant 0 : i32
    return %arg0, %arg1 : i32, i32
  }
  func.func @transform_1(%arg0: i32, %arg1: i32) -> (i32, i32) {
    %c0_i32 = arith.constant 0 : i32
    %c0_i32_0 = arith.constant 0 : i32
    return %arg1, %c0_i32 : i32, i32
  }
  func.func @transform_2(%arg0: i32, %arg1: i32) -> (i32, i32) {
    %c0_i32 = arith.constant 0 : i32
    %c0_i32_0 = arith.constant 0 : i32
    %c0_i32_1 = arith.constant 0 : i32
    return %c0_i32, %c0_i32_0 : i32, i32
  }
  func.func @transform_3(%arg0: i32, %arg1: i32) -> (i32, i32) {
    %c0_i32 = arith.constant 0 : i32
    %c0_i32_0 = arith.constant 0 : i32
    return %arg0, %c0_i32 : i32, i32
  }
}

</mosaic_0001>

<llo_original>
// kernel: tpu_custom_call.1
$region0: #{tpu_custom_call.1}
  #allocation0 [shape = 'u32[]', space=smem, size = 0x4, offset = 0x4, fixed_abs, tag = 'smem constant byte address 0x4 - core index']
  #allocation1 [shape = 'u32[144,128]{1,0:T(1,128)}', space=vmem, size = 0x12000, scoped, tag = 'internal scratch']
  #allocation2 [shape = 'f32[512,128]{1,0:T(8,128)}', space=vmem, size = 0x40000, scoped, tag = 'scratch operand']
  %s0 = inlined_call_operand.vmem [shape: f32[512,36], index: 0, kind: input, shape index: {}]
  %s1 = inlined_call_operand.vmem [shape: f32[36,128], index: 1, kind: input, shape index: {}]
  %s2 = inlined_call_operand.vmem [shape: f32[1,128], index: 2, kind: input, shape index: {}]
  %s3 = inlined_call_operand.hbm [shape: f32[512,128], index: 3, kind: output, shape index: {}]
  %s4 = sld [smem:[#allocation0]]
  $region30: #{tpu_custom_call.1} parent=0
    _
  %s6 = ssub.s32 1, %s4
  %s7 = scalar_select 0, %s6, %s4
  $region1: #{tpu_custom_call.1} parent=0
    #allocation3 [shape = 'u8[262144]{0}', space=vmem, size = 0x40000, scoped, tag = 'output window, operand 0, single buffered']
    #allocation4 [shape = 's32[1]{0}', space=sflag, size = 0x4, scoped, tag = 'scoped memory for tpu_custom_call.1']
    %8 = vsyncpa [#allocation4], 0
    // Predicated region
    $region2: #{tpu_custom_call.1} parent=1 // pred_check
      _
    $region3: #{tpu_custom_call.1} parent=1 // pred_check_branch
      %10 = sbr.rel (0) target = $region5
    $region4: #{tpu_custom_call.1} parent=1 // pred_region
      _
    $region5: #{tpu_custom_call.1} parent=1 // pred_fallthru
      _
    // Predicated region
    $region6: #{tpu_custom_call.1} parent=1 // pred_check
      _
    $region7: #{tpu_custom_call.1} parent=1 // pred_check_branch
      %12 = sbr.rel (0) target = $region9
    $region8: #{tpu_custom_call.1} parent=1 // pred_region
      _
    $region9: #{tpu_custom_call.1} parent=1 // pred_fallthru
      _
    // Predicated region
    $region10: #{tpu_custom_call.1} parent=1 // pred_check
      _
    $region11: #{tpu_custom_call.1} parent=1 // pred_check_branch
      %14 = sbr.rel (0) target = $region13
    $region12: #{tpu_custom_call.1} parent=1 // pred_region
      _
    $region13: #{tpu_custom_call.1} parent=1 // pred_fallthru
      _
    %p15 = scmp.eq.s32.totalorder 0, 0
    // Predicated region
    $region14: #{tpu_custom_call.1} parent=1 // pred_check
      %p16 = pneg %p15
    $region15: #{tpu_custom_call.1} parent=1 // pred_check_branch
      %18 = sbr.rel (%p16) target = $region17
    $region16: #{tpu_custom_call.1} parent=1 // pred_region
      %19 = vst [vmem:[#allocation2] sm:$0xff] 0.0
      %20 = vst [vmem:[#allocation2 + $0x8] sm:$0xff] 0.0
      %21 = vst [vmem:[#allocation2 + $0x10] sm:$0xff] 0.0
      %22 = vst [vmem:[#allocation2 + $0x18] sm:$0xff] 0.0
      %23 = vst [vmem:[#allocation2 + $0x20] sm:$0xff] 0.0
      %24 = vst [vmem:[#allocation2 + $0x28] sm:$0xff] 0.0
      %25 = vst [vmem:[#allocation2 + $0x30] sm:$0xff] 0.0
      %26 = vst [vmem:[#allocation2 + $0x38] sm:$0xff] 0.0
      %27 = vst [vmem:[#allocation2 + $0x40] sm:$0xff] 0.0
      %28 = vst [vmem:[#allocation2 + $0x48] sm:$0xff] 0.0
      %29 = vst [vmem:[#allocation2 + $0x50] sm:$0xff] 0.0
      %30 = vst [vmem:[#allocation2 + $0x58] sm:$0xff] 0.0
      %31 = vst [vmem:[#allocation2 + $0x60] sm:$0xff] 0.0
      %32 = vst [vmem:[#allocation2 + $0x68] sm:$0xff] 0.0
      %33 = vst [vmem:[#allocation2 + $0x70] sm:$0xff] 0.0
      %34 = vst [vmem:[#allocation2 + $0x78] sm:$0xff] 0.0
      %35 = vst [vmem:[#allocation2 + $0x80] sm:$0xff] 0.0
      %36 = vst [vmem:[#allocation2 + $0x88] sm:$0xff] 0.0
      %37 = vst [vmem:[#allocation2 + $0x90] sm:$0xff] 0.0
      %38 = vst [vmem:[#allocation2 + $0x98] sm:$0xff] 0.0
      %39 = vst [vmem:[#allocation2 + $0xa0] sm:$0xff] 0.0
      %40 = vst [vmem:[#allocation2 + $0xa8] sm:$0xff] 0.0
      %41 = vst [vmem:[#allocation2 + $0xb0] sm:$0xff] 0.0
      %42 = vst [vmem:[#allocation2 + $0xb8] sm:$0xff] 0.0
      %43 = vst [vmem:[#allocation2 + $0xc0] sm:$0xff] 0.0
      %44 = vst [vmem:[#allocation2 + $0xc8] sm:$0xff] 0.0
      %45 = vst [vmem:[#allocation2 + $0xd0] sm:$0xff] 0.0
      %46 = vst [vmem:[#allocation2 + $0xd8] sm:$0xff] 0.0
      %47 = vst [vmem:[#allocation2 + $0xe0] sm:$0xff] 0.0
      %48 = vst [vmem:[#allocation2 + $0xe8] sm:$0xff] 0.0
      %49 = vst [vmem:[#allocation2 + $0xf0] sm:$0xff] 0.0
      %50 = vst [vmem:[#allocation2 + $0xf8] sm:$0xff] 0.0
      %51 = vst [vmem:[#allocation2 + $0x100] sm:$0xff] 0.0
      %52 = vst [vmem:[#allocation2 + $0x108] sm:$0xff] 0.0
      %53 = vst [vmem:[#allocation2 + $0x110] sm:$0xff] 0.0
      %54 = vst [vmem:[#allocation2 + $0x118] sm:$0xff] 0.0
      %55 = vst [vmem:[#allocation2 + $0x120] sm:$0xff] 0.0
      %56 = vst [vmem:[#allocation2 + $0x128] sm:$0xff] 0.0
      %57 = vst [vmem:[#allocation2 + $0x130] sm:$0xff] 0.0
      %58 = vst [vmem:[#allocation2 + $0x138] sm:$0xff] 0.0
      %59 = vst [vmem:[#allocation2 + $0x140] sm:$0xff] 0.0
      %60 = vst [vmem:[#allocation2 + $0x148] sm:$0xff] 0.0
      %61 = vst [vmem:[#allocation2 + $0x150] sm:$0xff] 0.0
      %62 = vst [vmem:[#allocation2 + $0x158] sm:$0xff] 0.0
      %63 = vst [vmem:[#allocation2 + $0x160] sm:$0xff] 0.0
      %64 = vst [vmem:[#allocation2 + $0x168] sm:$0xff] 0.0
      %65 = vst [vmem:[#allocation2 + $0x170] sm:$0xff] 0.0
      %66 = vst [vmem:[#allocation2 + $0x178] sm:$0xff] 0.0
      %67 = vst [vmem:[#allocation2 + $0x180] sm:$0xff] 0.0
      %68 = vst [vmem:[#allocation2 + $0x188] sm:$0xff] 0.0
      %69 = vst [vmem:[#allocation2 + $0x190] sm:$0xff] 0.0
      %70 = vst [vmem:[#allocation2 + $0x198] sm:$0xff] 0.0
      %71 = vst [vmem:[#allocation2 + $0x1a0] sm:$0xff] 0.0
      %72 = vst [vmem:[#allocation2 + $0x1a8] sm:$0xff] 0.0
      %73 = vst [vmem:[#allocation2 + $0x1b0] sm:$0xff] 0.0
      %74 = vst [vmem:[#allocation2 + $0x1b8] sm:$0xff] 0.0
      %75 = vst [vmem:[#allocation2 + $0x1c0] sm:$0xff] 0.0
      %76 = vst [vmem:[#allocation2 + $0x1c8] sm:$0xff] 0.0
      %77 = vst [vmem:[#allocation2 + $0x1d0] sm:$0xff] 0.0
      %78 = vst [vmem:[#allocation2 + $0x1d8] sm:$0xff] 0.0
      %79 = vst [vmem:[#allocation2 + $0x1e0] sm:$0xff] 0.0
      %80 = vst [vmem:[#allocation2 + $0x1e8] sm:$0xff] 0.0
      %81 = vst [vmem:[#allocation2 + $0x1f0] sm:$0xff] 0.0
      %82 = vst [vmem:[#allocation2 + $0x1f8] sm:$0xff] 0.0
    $region17: #{tpu_custom_call.1} parent=1 // pred_fallthru
      _
    %v83 = vld [vmem:[#allocation2] sm:$0xff]
    %v84 = vld [vmem:[#allocation2 + $0x8] sm:$0xff]
    %v85 = vld [vmem:[#allocation2 + $0x10] sm:$0xff]
    %v86 = vld [vmem:[#allocation2 + $0x18] sm:$0xff]
    %v87 = vld [vmem:[#allocation2 + $0x20] sm:$0xff]
    %v88 = vld [vmem:[#allocation2 + $0x28] sm:$0xff]
    %v89 = vld [vmem:[#allocation2 + $0x30] sm:$0xff]
    %v90 = vld [vmem:[#allocation2 + $0x38] sm:$0xff]
    %v91 = vld [vmem:[#allocation2 + $0x40] sm:$0xff]
    %v92 = vld [vmem:[#allocation2 + $0x48] sm:$0xff]
    %v93 = vld [vmem:[#allocation2 + $0x50] sm:$0xff]
    %v94 = vld [vmem:[#allocation2 + $0x58] sm:$0xff]
    %v95 = vld [vmem:[#allocation2 + $0x60] sm:$0xff]
    %v96 = vld [vmem:[#allocation2 + $0x68] sm:$0xff]
    %v97 = vld [vmem:[#allocation2 + $0x70] sm:$0xff]
    %v98 = vld [vmem:[#allocation2 + $0x78] sm:$0xff]
    %v99 = vld [vmem:[#allocation2 + $0x80] sm:$0xff]
    %v100 = vld [vmem:[#allocation2 + $0x88] sm:$0xff]
    %v101 = vld [vmem:[#allocation2 + $0x90] sm:$0xff]
    %v102 = vld [vmem:[#allocation2 + $0x98] sm:$0xff]
    %v103 = vld [vmem:[#allocation2 + $0xa0] sm:$0xff]
    %v104 = vld [vmem:[#allocation2 + $0xa8] sm:$0xff]
    %v105 = vld [vmem:[#allocation2 + $0xb0] sm:$0xff]
    %v106 = vld [vmem:[#allocation2 + $0xb8] sm:$0xff]
    %v107 = vld [vmem:[#allocation2 + $0xc0] sm:$0xff]
    %v108 = vld [vmem:[#allocation2 + $0xc8] sm:$0xff]
    %v109 = vld [vmem:[#allocation2 + $0xd0] sm:$0xff]
    %v110 = vld [vmem:[#allocation2 + $0xd8] sm:$0xff]
    %v111 = vld [vmem:[#allocation2 + $0xe0] sm:$0xff]
    %v112 = vld [vmem:[#allocation2 + $0xe8] sm:$0xff]
    %v113 = vld [vmem:[#allocation2 + $0xf0] sm:$0xff]
    %v114 = vld [vmem:[#allocation2 + $0xf8] sm:$0xff]
    %v115 = vld [vmem:[#allocation2 + $0x100] sm:$0xff]
    %v116 = vld [vmem:[#allocation2 + $0x108] sm:$0xff]
    %v117 = vld [vmem:[#allocation2 + $0x110] sm:$0xff]
    %v118 = vld [vmem:[#allocation2 + $0x118] sm:$0xff]
    %v119 = vld [vmem:[#allocation2 + $0x120] sm:$0xff]
    %v120 = vld [vmem:[#allocation2 + $0x128] sm:$0xff]
    %v121 = vld [vmem:[#allocation2 + $0x130] sm:$0xff]
    %v122 = vld [vmem:[#allocation2 + $0x138] sm:$0xff]
    %v123 = vld [vmem:[#allocation2 + $0x140] sm:$0xff]
    %v124 = vld [vmem:[#allocation2 + $0x148] sm:$0xff]
    %v125 = vld [vmem:[#allocation2 + $0x150] sm:$0xff]
    %v126 = vld [vmem:[#allocation2 + $0x158] sm:$0xff]
    %v127 = vld [vmem:[#allocation2 + $0x160] sm:$0xff]
    %v128 = vld [vmem:[#allocation2 + $0x168] sm:$0xff]
    %v129 = vld [vmem:[#allocation2 + $0x170] sm:$0xff]
    %v130 = vld [vmem:[#allocation2 + $0x178] sm:$0xff]
    %v131 = vld [vmem:[#allocation2 + $0x180] sm:$0xff]
    %v132 = vld [vmem:[#allocation2 + $0x188] sm:$0xff]
    %v133 = vld [vmem:[#allocation2 + $0x190] sm:$0xff]
    %v134 = vld [vmem:[#allocation2 + $0x198] sm:$0xff]
    %v135 = vld [vmem:[#allocation2 + $0x1a0] sm:$0xff]
    %v136 = vld [vmem:[#allocation2 + $0x1a8] sm:$0xff]
    %v137 = vld [vmem:[#allocation2 + $0x1b0] sm:$0xff]
    %v138 = vld [vmem:[#allocation2 + $0x1b8] sm:$0xff]
    %v139 = vld [vmem:[#allocation2 + $0x1c0] sm:$0xff]
    %v140 = vld [vmem:[#allocation2 + $0x1c8] sm:$0xff]
    %v141 = vld [vmem:[#allocation2 + $0x1d0] sm:$0xff]
    %v142 = vld [vmem:[#allocation2 + $0x1d8] sm:$0xff]
    %v143 = vld [vmem:[#allocation2 + $0x1e0] sm:$0xff]
    %v144 = vld [vmem:[#allocation2 + $0x1e8] sm:$0xff]
    %v145 = vld [vmem:[#allocation2 + $0x1f0] sm:$0xff]
    %v146 = vld [vmem:[#allocation2 + $0x1f8] sm:$0xff]
    %v147 = vld [vmem:[%s0] sm:$0xff]
    %v148 = vld [vmem:[%s0 + $0x8] sm:$0xff]
    %v149 = vld [vmem:[%s0 + $0x10] sm:$0xff]
    %v150 = vld [vmem:[%s0 + $0x18] sm:$0xff]
    %v151 = vld [vmem:[%s0 + $0x20] sm:$0xff]
    %v152 = vld [vmem:[%s0 + $0x28] sm:$0xff]
    %v153 = vld [vmem:[%s0 + $0x30] sm:$0xff]
    %v154 = vld [vmem:[%s0 + $0x38] sm:$0xff]
    %v155 = vld [vmem:[%s0 + $0x40] sm:$0xff]
    %v156 = vld [vmem:[%s0 + $0x48] sm:$0xff]
    %v157 = vld [vmem:[%s0 + $0x50] sm:$0xff]
    %v158 = vld [vmem:[%s0 + $0x58] sm:$0xff]
    %v159 = vld [vmem:[%s0 + $0x60] sm:$0xff]
    %v160 = vld [vmem:[%s0 + $0x68] sm:$0xff]
    %v161 = vld [vmem:[%s0 + $0x70] sm:$0xff]
    %v162 = vld [vmem:[%s0 + $0x78] sm:$0xff]
    %v163 = vld [vmem:[%s0 + $0x80] sm:$0xff]
    %v164 = vld [vmem:[%s0 + $0x88] sm:$0xff]
    %v165 = vld [vmem:[%s0 + $0x90] sm:$0xff]
    %v166 = vld [vmem:[%s0 + $0x98] sm:$0xff]
    %v167 = vld [vmem:[%s0 + $0xa0] sm:$0xff]
    %v168 = vld [vmem:[%s0 + $0xa8] sm:$0xff]
    %v169 = vld [vmem:[%s0 + $0xb0] sm:$0xff]
    %v170 = vld [vmem:[%s0 + $0xb8] sm:$0xff]
    %v171 = vld [vmem:[%s0 + $0xc0] sm:$0xff]
    %v172 = vld [vmem:[%s0 + $0xc8] sm:$0xff]
    %v173 = vld [vmem:[%s0 + $0xd0] sm:$0xff]
    %v174 = vld [vmem:[%s0 + $0xd8] sm:$0xff]
    %v175 = vld [vmem:[%s0 + $0xe0] sm:$0xff]
    %v176 = vld [vmem:[%s0 + $0xe8] sm:$0xff]
    %v177 = vld [vmem:[%s0 + $0xf0] sm:$0xff]
    %v178 = vld [vmem:[%s0 + $0xf8] sm:$0xff]
    %v179 = vld [vmem:[%s0 + $0x100] sm:$0xff]
    %v180 = vld [vmem:[%s0 + $0x108] sm:$0xff]
    %v181 = vld [vmem:[%s0 + $0x110] sm:$0xff]
    %v182 = vld [vmem:[%s0 + $0x118] sm:$0xff]
    %v183 = vld [vmem:[%s0 + $0x120] sm:$0xff]
    %v184 = vld [vmem:[%s0 + $0x128] sm:$0xff]
    %v185 = vld [vmem:[%s0 + $0x130] sm:$0xff]
    %v186 = vld [vmem:[%s0 + $0x138] sm:$0xff]
    %v187 = vld [vmem:[%s0 + $0x140] sm:$0xff]
    %v188 = vld [vmem:[%s0 + $0x148] sm:$0xff]
    %v189 = vld [vmem:[%s0 + $0x150] sm:$0xff]
    %v190 = vld [vmem:[%s0 + $0x158] sm:$0xff]
    %v191 = vld [vmem:[%s0 + $0x160] sm:$0xff]
    %v192 = vld [vmem:[%s0 + $0x168] sm:$0xff]
    %v193 = vld [vmem:[%s0 + $0x170] sm:$0xff]
    %v194 = vld [vmem:[%s0 + $0x178] sm:$0xff]
    %v195 = vld [vmem:[%s0 + $0x180] sm:$0xff]
    %v196 = vld [vmem:[%s0 + $0x188] sm:$0xff]
    %v197 = vld [vmem:[%s0 + $0x190] sm:$0xff]
    %v198 = vld [vmem:[%s0 + $0x198] sm:$0xff]
    %v199 = vld [vmem:[%s0 + $0x1a0] sm:$0xff]
    %v200 = vld [vmem:[%s0 + $0x1a8] sm:$0xff]
    %v201 = vld [vmem:[%s0 + $0x1b0] sm:$0xff]
    %v202 = vld [vmem:[%s0 + $0x1b8] sm:$0xff]
    %v203 = vld [vmem:[%s0 + $0x1c0] sm:$0xff]
    %v204 = vld [vmem:[%s0 + $0x1c8] sm:$0xff]
    %v205 = vld [vmem:[%s0 + $0x1d0] sm:$0xff]
    %v206 = vld [vmem:[%s0 + $0x1d8] sm:$0xff]
    %v207 = vld [vmem:[%s0 + $0x1e0] sm:$0xff]
    %v208 = vld [vmem:[%s0 + $0x1e8] sm:$0xff]
    %v209 = vld [vmem:[%s0 + $0x1f0] sm:$0xff]
    %v210 = vld [vmem:[%s0 + $0x1f8] sm:$0xff]
    %v211 = vld [vmem:[%s1] sm:$0xff]
    %v212 = vld [vmem:[%s1 + $0x8] sm:$0xff]
    %v213 = vld [vmem:[%s1 + $0x10] sm:$0xff]
    %v214 = vld [vmem:[%s1 + $0x18] sm:$0xff]
    %v215 = vld [vmem:[%s1 + $0x20] sm:$0xf]
    %vm216 = vcmask 293888
    %v218 = vsel %vm216, %v147, 0
    %v221 = vsel %vm216, %v148, 0
    %v224 = vsel %vm216, %v149, 0
    %v227 = vsel %vm216, %v150, 0
    %v230 = vsel %vm216, %v151, 0
    %v233 = vsel %vm216, %v152, 0
    %v236 = vsel %vm216, %v153, 0
    %v239 = vsel %vm216, %v154, 0
    %v242 = vsel %vm216, %v155, 0
    %v245 = vsel %vm216, %v156, 0
    %v248 = vsel %vm216, %v157, 0
    %v251 = vsel %vm216, %v158, 0
    %v254 = vsel %vm216, %v159, 0
    %v257 = vsel %vm216, %v160, 0
    %v260 = vsel %vm216, %v161, 0
    %v263 = vsel %vm216, %v162, 0
    %v266 = vsel %vm216, %v163, 0
    %v269 = vsel %vm216, %v164, 0
    %v272 = vsel %vm216, %v165, 0
    %v275 = vsel %vm216, %v166, 0
    %v278 = vsel %vm216, %v167, 0
    %v281 = vsel %vm216, %v168, 0
    %v284 = vsel %vm216, %v169, 0
    %v287 = vsel %vm216, %v170, 0
    %v290 = vsel %vm216, %v171, 0
    %v293 = vsel %vm216, %v172, 0
    %v296 = vsel %vm216, %v173, 0
    %v299 = vsel %vm216, %v174, 0
    %v302 = vsel %vm216, %v175, 0
    %v305 = vsel %vm216, %v176, 0
    %v308 = vsel %vm216, %v177, 0
    %v311 = vsel %vm216, %v178, 0
    %v314 = vsel %vm216, %v179, 0
    %v317 = vsel %vm216, %v180, 0
    %v320 = vsel %vm216, %v181, 0
    %v323 = vsel %vm216, %v182, 0
    %v326 = vsel %vm216, %v183, 0
    %v329 = vsel %vm216, %v184, 0
    %v332 = vsel %vm216, %v185, 0
    %v335 = vsel %vm216, %v186, 0
    %v338 = vsel %vm216, %v187, 0
    %v341 = vsel %vm216, %v188, 0
    %v344 = vsel %vm216, %v189, 0
    %v347 = vsel %vm216, %v190, 0
    %v350 = vsel %vm216, %v191, 0
    %v353 = vsel %vm216, %v192, 0
    %v356 = vsel %vm216, %v193, 0
    %v359 = vsel %vm216, %v194, 0
    %v362 = vsel %vm216, %v195, 0
    %v365 = vsel %vm216, %v196, 0
    %v368 = vsel %vm216, %v197, 0
    %v371 = vsel %vm216, %v198, 0
    %v374 = vsel %vm216, %v199, 0
    %v377 = vsel %vm216, %v200, 0
    %v380 = vsel %vm216, %v201, 0
    %v383 = vsel %vm216, %v202, 0
    %v386 = vsel %vm216, %v203, 0
    %v389 = vsel %vm216, %v204, 0
    %v392 = vsel %vm216, %v205, 0
    %v395 = vsel %vm216, %v206, 0
    %v398 = vsel %vm216, %v207, 0
    %v401 = vsel %vm216, %v208, 0
    %v404 = vsel %vm216, %v209, 0
    %v407 = vsel %vm216, %v210, 0
    %vm409 = vcmask 1043456
    %v411 = vsel %vm409, %v215, 0
    %413 = vmatprep.subr.mxu0 0.0
    %414 = vmatpush1.msra.mxu0 %v211
    %415 = vmatprep.subr.mxu0 0.0
    %416 = vmatpush1.msra.mxu0 %v212
    %417 = vmatprep.subr.mxu0 0.0
    %418 = vmatpush1.msra.mxu0 %v213
    %419 = vmatprep.subr.mxu0 0.0
    %420 = vmatpush1.msra.mxu0 %v214
    %421 = vmatprep.subr.mxu0 0.0
    %422 = vmatpush1.msra.mxu0 %v411
    %423 = vmatprep.subr.mxu0 0.0
    %424 = vmatpush1.msra.mxu0 0.0
    %425 = vmatprep.subr.mxu0 0.0
    %426 = vmatpush1.msra.mxu0 0.0
    %427 = vmatprep.subr.mxu0 0.0
    %428 = vmatpush1.msra.mxu0 0.0
    %429 = vmatprep.subr.mxu0 0.0
    %430 = vmatpush1.msra.mxu0 0.0
    %431 = vmatprep.subr.mxu0 0.0
    %432 = vmatpush1.msra.mxu0 0.0
    %433 = vmatprep.subr.mxu0 0.0
    %434 = vmatpush1.msra.mxu0 0.0
    %435 = vmatprep.subr.mxu0 0.0
    %436 = vmatpush1.msra.mxu0 0.0
    %437 = vmatprep.subr.mxu0 0.0
    %438 = vmatpush1.msra.mxu0 0.0
    %439 = vmatprep.subr.mxu0 0.0
    %440 = vmatpush1.msra.mxu0 0.0
    %441 = vmatprep.subr.mxu0 0.0
    %442 = vmatpush1.msra.mxu0 0.0
    %443 = vmatprep.subr.mxu0 0.0
    %444 = vmatpush1.msra.mxu0 0.0
    %445 = vmatprep.subr.mxu0 0.0
    %446 = vmatpush1.msra.mxu0 0.0
    %447 = vmatprep.subr.mxu0 0.0
    %448 = vmatpush1.msra.mxu0 0.0
    %449 = vmatprep.subr.mxu0 0.0
    %450 = vmatpush1.msra.mxu0 0.0
    %451 = vmatprep.subr.mxu0 0.0
    %452 = vmatpush1.msra.mxu0 0.0
    %453 = vmatprep.subr.mxu0 0.0
    %454 = vmatpush1.msra.mxu0 0.0
    %455 = vmatprep.subr.mxu0 0.0
    %456 = vmatpush1.msra.mxu0 0.0
    %457 = vmatprep.subr.mxu0 0.0
    %458 = vmatpush1.msra.mxu0 0.0
    %459 = vmatprep.subr.mxu0 0.0
    %460 = vmatpush1.msra.mxu0 0.0
    %461 = vmatprep.subr.mxu0 0.0
    %462 = vmatpush1.msra.mxu0 0.0
    %463 = vmatprep.subr.mxu0 0.0
    %464 = vmatpush1.msra.mxu0 0.0
    %465 = vmatprep.subr.mxu0 0.0
    %466 = vmatpush1.msra.mxu0 0.0
    %467 = vmatprep.subr.mxu0 0.0
    %468 = vmatpush1.msra.mxu0 0.0
    %469 = vmatprep.subr.mxu0 0.0
    %470 = vmatpush1.msra.mxu0 0.0
    %471 = vmatprep.subr.mxu0 0.0
    %472 = vmatpush1.msra.mxu0 0.0
    %473 = vmatprep.subr.mxu0 0.0
    %474 = vmatpush1.msra.mxu0 0.0
    %475 = vmatprep.subr.mxu0 0.0
    %476 = vmatpush1.msra.mxu0 0.0
    %477 = vmatprep.mubr.f32.mxu0 0.0
    %478 = vmatmul.mubr.f32.gmra.mrb[0].mxu0 %v218
    %v479 = vpop.f32.mrb[0].mxu0
    %v480 = vadd.f32 0.0, %v479
    %v481 = vpop.f32.mrb[0].mxu0
    %482 = vmatprep.mubr.f32.mxu0 0.0
    %483 = vmatmul.mubr.f32.gmra.mrb[0].mxu0 %v221
    %v484 = vpop.f32.mrb[0].mxu0
    %v485 = vadd.f32 0.0, %v484
    %v486 = vpop.f32.mrb[0].mxu0
    %487 = vmatprep.mubr.f32.mxu0 0.0
    %488 = vmatmul.mubr.f32.gmra.mrb[0].mxu0 %v224
    %v489 = vpop.f32.mrb[0].mxu0
    %v490 = vadd.f32 0.0, %v489
    %v491 = vpop.f32.mrb[0].mxu0
    %492 = vmatprep.mubr.f32.mxu0 0.0
    %493 = vmatmul.mubr.f32.gmra.mrb[0].mxu0 %v227
    %v494 = vpop.f32.mrb[0].mxu0
    %v495 = vadd.f32 0.0, %v494
    %v496 = vpop.f32.mrb[0].mxu0
    %497 = vmatprep.mubr.f32.mxu0 0.0
    %498 = vmatmul.mubr.f32.gmra.mrb[0].mxu0 %v230
    %v499 = vpop.f32.mrb[0].mxu0
    %v500 = vadd.f32 0.0, %v499
    %v501 = vpop.f32.mrb[0].mxu0
    %502 = vmatprep.mubr.f32.mxu0 0.0
    %503 = vmatmul.mubr.f32.gmra.mrb[0].mxu0 %v233
    %v504 = vpop.f32.mrb[0].mxu0
    %v505 = vadd.f32 0.0, %v504
    %v506 = vpop.f32.mrb[0].mxu0
    %507 = vmatprep.mubr.f32.mxu0 0.0
    %508 = vmatmul.mubr.f32.gmra.mrb[0].mxu0 %v236
    %v509 = vpop.f32.mrb[0].mxu0
    %v510 = vadd.f32 0.0, %v509
    %v511 = vpop.f32.mrb[0].mxu0
    %512 = vmatprep.mubr.f32.mxu0 0.0
    %513 = vmatmul.mubr.f32.gmra.mrb[0].mxu0 %v239
    %v514 = vpop.f32.mrb[0].mxu0
    %v515 = vadd.f32 0.0, %v514
    %v516 = vpop.f32.mrb[0].mxu0
    %517 = vmatprep.mubr.f32.mxu0 0.0
    %518 = vmatmul.mubr.f32.gmra.mrb[0].mxu0 %v242
    %v519 = vpop.f32.mrb[0].mxu0
    %v520 = vadd.f32 0.0, %v519
    %v521 = vpop.f32.mrb[0].mxu0
    %522 = vmatprep.mubr.f32.mxu0 0.0
    %523 = vmatmul.mubr.f32.gmra.mrb[0].mxu0 %v245
    %v524 = vpop.f32.mrb[0].mxu0
    %v525 = vadd.f32 0.0, %v524
    %v526 = vpop.f32.mrb[0].mxu0
    %527 = vmatprep.mubr.f32.mxu0 0.0
    %528 = vmatmul.mubr.f32.gmra.mrb[0].mxu0 %v248
    %v529 = vpop.f32.mrb[0].mxu0
    %v530 = vadd.f32 0.0, %v529
    %v531 = vpop.f32.mrb[0].mxu0
    %532 = vmatprep.mubr.f32.mxu0 0.0
    %533 = vmatmul.mubr.f32.gmra.mrb[0].mxu0 %v251
    %v534 = vpop.f32.mrb[0].mxu0
    %v535 = vadd.f32 0.0, %v534
    %v536 = vpop.f32.mrb[0].mxu0
    %537 = vmatprep.mubr.f32.mxu0 0.0
    %538 = vmatmul.mubr.f32.gmra.mrb[0].mxu0 %v254
    %v539 = vpop.f32.mrb[0].mxu0
    %v540 = vadd.f32 0.0, %v539
    %v541 = vpop.f32.mrb[0].mxu0
    %542 = vmatprep.mubr.f32.mxu0 0.0
    %543 = vmatmul.mubr.f32.gmra.mrb[0].mxu0 %v257
    %v544 = vpop.f32.mrb[0].mxu0
    %v545 = vadd.f32 0.0, %v544
    %v546 = vpop.f32.mrb[0].mxu0
    %547 = vmatprep.mubr.f32.mxu0 0.0
    %548 = vmatmul.mubr.f32.gmra.mrb[0].mxu0 %v260
    %v549 = vpop.f32.mrb[0].mxu0
    %v550 = vadd.f32 0.0, %v549
    %v551 = vpop.f32.mrb[0].mxu0
    %552 = vmatprep.mubr.f32.mxu0 0.0
    %553 = vmatmul.mubr.f32.gmra.mrb[0].mxu0 %v263
    %v554 = vpop.f32.mrb[0].mxu0
    %v555 = vadd.f32 0.0, %v554
    %v556 = vpop.f32.mrb[0].mxu0
    %557 = vmatprep.mubr.f32.mxu0 0.0
    %558 = vmatmul.mubr.f32.gmra.mrb[0].mxu0 %v266
    %v559 = vpop.f32.mrb[0].mxu0
    %v560 = vadd.f32 0.0, %v559
    %v561 = vpop.f32.mrb[0].mxu0
    %562 = vmatprep.mubr.f32.mxu0 0.0
    %563 = vmatmul.mubr.f32.gmra.mrb[0].mxu0 %v269
    %v564 = vpop.f32.mrb[0].mxu0
    %v565 = vadd.f32 0.0, %v564
    %v566 = vpop.f32.mrb[0].mxu0
    %567 = vmatprep.mubr.f32.mxu0 0.0
    %568 = vmatmul.mubr.f32.gmra.mrb[0].mxu0 %v272
    %v569 = vpop.f32.mrb[0].mxu0
    %v570 = vadd.f32 0.0, %v569
    %v571 = vpop.f32.mrb[0].mxu0
    %572 = vmatprep.mubr.f32.mxu0 0.0
    %573 = vmatmul.mubr.f32.gmra.mrb[0].mxu0 %v275
    %v574 = vpop.f32.mrb[0].mxu0
    %v575 = vadd.f32 0.0, %v574
    %v576 = vpop.f32.mrb[0].mxu0
    %577 = vmatprep.mubr.f32.mxu0 0.0
    %578 = vmatmul.mubr.f32.gmra.mrb[0].mxu0 %v278
    %v579 = vpop.f32.mrb[0].mxu0
    %v580 = vadd.f32 0.0, %v579
    %v581 = vpop.f32.mrb[0].mxu0
    %582 = vmatprep.mubr.f32.mxu0 0.0
    %583 = vmatmul.mubr.f32.gmra.mrb[0].mxu0 %v281
    %v584 = vpop.f32.mrb[0].mxu0
    %v585 = vadd.f32 0.0, %v584
    %v586 = vpop.f32.mrb[0].mxu0
    %587 = vmatprep.mubr.f32.mxu0 0.0
    %588 = vmatmul.mubr.f32.gmra.mrb[0].mxu0 %v284
    %v589 = vpop.f32.mrb[0].mxu0
    %v590 = vadd.f32 0.0, %v589
    %v591 = vpop.f32.mrb[0].mxu0
    %592 = vmatprep.mubr.f32.mxu0 0.0
    %593 = vmatmul.mubr.f32.gmra.mrb[0].mxu0 %v287
    %v594 = vpop.f32.mrb[0].mxu0
    %v595 = vadd.f32 0.0, %v594
    %v596 = vpop.f32.mrb[0].mxu0
    %597 = vmatprep.mubr.f32.mxu0 0.0
    %598 = vmatmul.mubr.f32.gmra.mrb[0].mxu0 %v290
    %v599 = vpop.f32.mrb[0].mxu0
    %v600 = vadd.f32 0.0, %v599
    %v601 = vpop.f32.mrb[0].mxu0
    %602 = vmatprep.mubr.f32.mxu0 0.0
    %603 = vmatmul.mubr.f32.gmra.mrb[0].mxu0 %v293
    %v604 = vpop.f32.mrb[0].mxu0
    %v605 = vadd.f32 0.0, %v604
    %v606 = vpop.f32.mrb[0].mxu0
    %607 = vmatprep.mubr.f32.mxu0 0.0
    %608 = vmatmul.mubr.f32.gmra.mrb[0].mxu0 %v296
    %v609 = vpop.f32.mrb[0].mxu0
    %v610 = vadd.f32 0.0, %v609
    %v611 = vpop.f32.mrb[0].mxu0
    %612 = vmatprep.mubr.f32.mxu0 0.0
    %613 = vmatmul.mubr.f32.gmra.mrb[0].mxu0 %v299
    %v614 = vpop.f32.mrb[0].mxu0
    %v615 = vadd.f32 0.0, %v614
    %v616 = vpop.f32.mrb[0].mxu0
    %617 = vmatprep.mubr.f32.mxu0 0.0
    %618 = vmatmul.mubr.f32.gmra.mrb[0].mxu0 %v302
    %v619 = vpop.f32.mrb[0].mxu0
    %v620 = vadd.f32 0.0, %v619
    %v621 = vpop.f32.mrb[0].mxu0
    %622 = vmatprep.mubr.f32.mxu0 0.0
    %623 = vmatmul.mubr.f32.gmra.mrb[0].mxu0 %v305
    %v624 = vpop.f32.mrb[0].mxu0
    %v625 = vadd.f32 0.0, %v624
    %v626 = vpop.f32.mrb[0].mxu0
    %627 = vmatprep.mubr.f32.mxu0 0.0
    %628 = vmatmul.mubr.f32.gmra.mrb[0].mxu0 %v308
    %v629 = vpop.f32.mrb[0].mxu0
    %v630 = vadd.f32 0.0, %v629
    %v631 = vpop.f32.mrb[0].mxu0
    %632 = vmatprep.mubr.f32.mxu0 0.0
    %633 = vmatmul.mubr.f32.gmra.mrb[0].mxu0 %v311
    %v634 = vpop.f32.mrb[0].mxu0
    %v635 = vadd.f32 0.0, %v634
    %v636 = vpop.f32.mrb[0].mxu0
    %637 = vmatprep.mubr.f32.mxu0 0.0
    %638 = vmatmul.mubr.f32.gmra.mrb[0].mxu0 %v314
    %v639 = vpop.f32.mrb[0].mxu0
    %v640 = vadd.f32 0.0, %v639
    %v641 = vpop.f32.mrb[0].mxu0
    %642 = vmatprep.mubr.f32.mxu0 0.0
    %643 = vmatmul.mubr.f32.gmra.mrb[0].mxu0 %v317
    %v644 = vpop.f32.mrb[0].mxu0
    %v645 = vadd.f32 0.0, %v644
    %v646 = vpop.f32.mrb[0].mxu0
    %647 = vmatprep.mubr.f32.mxu0 0.0
    %648 = vmatmul.mubr.f32.gmra.mrb[0].mxu0 %v320
    %v649 = vpop.f32.mrb[0].mxu0
    %v650 = vadd.f32 0.0, %v649
    %v651 = vpop.f32.mrb[0].mxu0
    %652 = vmatprep.mubr.f32.mxu0 0.0
    %653 = vmatmul.mubr.f32.gmra.mrb[0].mxu0 %v323
    %v654 = vpop.f32.mrb[0].mxu0
    %v655 = vadd.f32 0.0, %v654
    %v656 = vpop.f32.mrb[0].mxu0
    %657 = vmatprep.mubr.f32.mxu0 0.0
    %658 = vmatmul.mubr.f32.gmra.mrb[0].mxu0 %v326
    %v659 = vpop.f32.mrb[0].mxu0
    %v660 = vadd.f32 0.0, %v659
    %v661 = vpop.f32.mrb[0].mxu0
    %662 = vmatprep.mubr.f32.mxu0 0.0
    %663 = vmatmul.mubr.f32.gmra.mrb[0].mxu0 %v329
    %v664 = vpop.f32.mrb[0].mxu0
    %v665 = vadd.f32 0.0, %v664
    %v666 = vpop.f32.mrb[0].mxu0
    %667 = vmatprep.mubr.f32.mxu0 0.0
    %668 = vmatmul.mubr.f32.gmra.mrb[0].mxu0 %v332
    %v669 = vpop.f32.mrb[0].mxu0
    %v670 = vadd.f32 0.0, %v669
    %v671 = vpop.f32.mrb[0].mxu0
    %672 = vmatprep.mubr.f32.mxu0 0.0
    %673 = vmatmul.mubr.f32.gmra.mrb[0].mxu0 %v335
    %v674 = vpop.f32.mrb[0].mxu0
    %v675 = vadd.f32 0.0, %v674
    %v676 = vpop.f32.mrb[0].mxu0
    %677 = vmatprep.mubr.f32.mxu0 0.0
    %678 = vmatmul.mubr.f32.gmra.mrb[0].mxu0 %v338
    %v679 = vpop.f32.mrb[0].mxu0
    %v680 = vadd.f32 0.0, %v679
    %v681 = vpop.f32.mrb[0].mxu0
    %682 = vmatprep.mubr.f32.mxu0 0.0
    %683 = vmatmul.mubr.f32.gmra.mrb[0].mxu0 %v341
    %v684 = vpop.f32.mrb[0].mxu0
    %v685 = vadd.f32 0.0, %v684
    %v686 = vpop.f32.mrb[0].mxu0
    %687 = vmatprep.mubr.f32.mxu0 0.0
    %688 = vmatmul.mubr.f32.gmra.mrb[0].mxu0 %v344
    %v689 = vpop.f32.mrb[0].mxu0
    %v690 = vadd.f32 0.0, %v689
    %v691 = vpop.f32.mrb[0].mxu0
    %692 = vmatprep.mubr.f32.mxu0 0.0
    %693 = vmatmul.mubr.f32.gmra.mrb[0].mxu0 %v347
    %v694 = vpop.f32.mrb[0].mxu0
    %v695 = vadd.f32 0.0, %v694
    %v696 = vpop.f32.mrb[0].mxu0
    %697 = vmatprep.mubr.f32.mxu0 0.0
    %698 = vmatmul.mubr.f32.gmra.mrb[0].mxu0 %v350
    %v699 = vpop.f32.mrb[0].mxu0
    %v700 = vadd.f32 0.0, %v699
    %v701 = vpop.f32.mrb[0].mxu0
    %702 = vmatprep.mubr.f32.mxu0 0.0
    %703 = vmatmul.mubr.f32.gmra.mrb[0].mxu0 %v353
    %v704 = vpop.f32.mrb[0].mxu0
    %v705 = vadd.f32 0.0, %v704
    %v706 = vpop.f32.mrb[0].mxu0
    %707 = vmatprep.mubr.f32.mxu0 0.0
    %708 = vmatmul.mubr.f32.gmra.mrb[0].mxu0 %v356
    %v709 = vpop.f32.mrb[0].mxu0
    %v710 = vadd.f32 0.0, %v709
    %v711 = vpop.f32.mrb[0].mxu0
    %712 = vmatprep.mubr.f32.mxu0 0.0
    %713 = vmatmul.mubr.f32.gmra.mrb[0].mxu0 %v359
    %v714 = vpop.f32.mrb[0].mxu0
    %v715 = vadd.f32 0.0, %v714
    %v716 = vpop.f32.mrb[0].mxu0
    %717 = vmatprep.mubr.f32.mxu0 0.0
    %718 = vmatmul.mubr.f32.gmra.mrb[0].mxu0 %v362
    %v719 = vpop.f32.mrb[0].mxu0
    %v720 = vadd.f32 0.0, %v719
    %v721 = vpop.f32.mrb[0].mxu0
    %722 = vmatprep.mubr.f32.mxu0 0.0
    %723 = vmatmul.mubr.f32.gmra.mrb[0].mxu0 %v365
    %v724 = vpop.f32.mrb[0].mxu0
    %v725 = vadd.f32 0.0, %v724
    %v726 = vpop.f32.mrb[0].mxu0
    %727 = vmatprep.mubr.f32.mxu0 0.0
    %728 = vmatmul.mubr.f32.gmra.mrb[0].mxu0 %v368
    %v729 = vpop.f32.mrb[0].mxu0
    %v730 = vadd.f32 0.0, %v729
    %v731 = vpop.f32.mrb[0].mxu0
    %732 = vmatprep.mubr.f32.mxu0 0.0
    %733 = vmatmul.mubr.f32.gmra.mrb[0].mxu0 %v371
    %v734 = vpop.f32.mrb[0].mxu0
    %v735 = vadd.f32 0.0, %v734
    %v736 = vpop.f32.mrb[0].mxu0
    %737 = vmatprep.mubr.f32.mxu0 0.0
    %738 = vmatmul.mubr.f32.gmra.mrb[0].mxu0 %v374
    %v739 = vpop.f32.mrb[0].mxu0
    %v740 = vadd.f32 0.0, %v739
    %v741 = vpop.f32.mrb[0].mxu0
    %742 = vmatprep.mubr.f32.mxu0 0.0
    %743 = vmatmul.mubr.f32.gmra.mrb[0].mxu0 %v377
    %v744 = vpop.f32.mrb[0].mxu0
    %v745 = vadd.f32 0.0, %v744
    %v746 = vpop.f32.mrb[0].mxu0
    %747 = vmatprep.mubr.f32.mxu0 0.0
    %748 = vmatmul.mubr.f32.gmra.mrb[0].mxu0 %v380
    %v749 = vpop.f32.mrb[0].mxu0
    %v750 = vadd.f32 0.0, %v749
    %v751 = vpop.f32.mrb[0].mxu0
    %752 = vmatprep.mubr.f32.mxu0 0.0
    %753 = vmatmul.mubr.f32.gmra.mrb[0].mxu0 %v383
    %v754 = vpop.f32.mrb[0].mxu0
    %v755 = vadd.f32 0.0, %v754
    %v756 = vpop.f32.mrb[0].mxu0
    %757 = vmatprep.mubr.f32.mxu0 0.0
    %758 = vmatmul.mubr.f32.gmra.mrb[0].mxu0 %v386
    %v759 = vpop.f32.mrb[0].mxu0
    %v760 = vadd.f32 0.0, %v759
    %v761 = vpop.f32.mrb[0].mxu0
    %762 = vmatprep.mubr.f32.mxu0 0.0
    %763 = vmatmul.mubr.f32.gmra.mrb[0].mxu0 %v389
    %v764 = vpop.f32.mrb[0].mxu0
    %v765 = vadd.f32 0.0, %v764
    %v766 = vpop.f32.mrb[0].mxu0
    %767 = vmatprep.mubr.f32.mxu0 0.0
    %768 = vmatmul.mubr.f32.gmra.mrb[0].mxu0 %v392
    %v769 = vpop.f32.mrb[0].mxu0
    %v770 = vadd.f32 0.0, %v769
    %v771 = vpop.f32.mrb[0].mxu0
    %772 = vmatprep.mubr.f32.mxu0 0.0
    %773 = vmatmul.mubr.f32.gmra.mrb[0].mxu0 %v395
    %v774 = vpop.f32.mrb[0].mxu0
    %v775 = vadd.f32 0.0, %v774
    %v776 = vpop.f32.mrb[0].mxu0
    %777 = vmatprep.mubr.f32.mxu0 0.0
    %778 = vmatmul.mubr.f32.gmra.mrb[0].mxu0 %v398
    %v779 = vpop.f32.mrb[0].mxu0
    %v780 = vadd.f32 0.0, %v779
    %v781 = vpop.f32.mrb[0].mxu0
    %782 = vmatprep.mubr.f32.mxu0 0.0
    %783 = vmatmul.mubr.f32.gmra.mrb[0].mxu0 %v401
    %v784 = vpop.f32.mrb[0].mxu0
    %v785 = vadd.f32 0.0, %v784
    %v786 = vpop.f32.mrb[0].mxu0
    %787 = vmatprep.mubr.f32.mxu0 0.0
    %788 = vmatmul.mubr.f32.gmra.mrb[0].mxu0 %v404
    %v789 = vpop.f32.mrb[0].mxu0
    %v790 = vadd.f32 0.0, %v789
    %v791 = vpop.f32.mrb[0].mxu0
    %792 = vmatprep.mubr.f32.mxu0 0.0
    %793 = vmatmul.mubr.f32.gmra.mrb[0].mxu0 %v407
    %v794 = vpop.f32.mrb[0].mxu0
    %v795 = vadd.f32 0.0, %v794
    %v796 = vpop.f32.mrb[0].mxu0
    %797 = vdwg.mxu0
    %v798 = vadd.f32 %v83, %v480
    %v799 = vadd.f32 %v84, %v485
    %v800 = vadd.f32 %v85, %v490
    %v801 = vadd.f32 %v86, %v495
    %v802 = vadd.f32 %v87, %v500
    %v803 = vadd.f32 %v88, %v505
    %v804 = vadd.f32 %v89, %v510
    %v805 = vadd.f32 %v90, %v515
    %v806 = vadd.f32 %v91, %v520
    %v807 = vadd.f32 %v92, %v525
    %v808 = vadd.f32 %v93, %v530
    %v809 = vadd.f32 %v94, %v535
    %v810 = vadd.f32 %v95, %v540
    %v811 = vadd.f32 %v96, %v545
    %v812 = vadd.f32 %v97, %v550
    %v813 = vadd.f32 %v98, %v555
    %v814 = vadd.f32 %v99, %v560
    %v815 = vadd.f32 %v100, %v565
    %v816 = vadd.f32 %v101, %v570
    %v817 = vadd.f32 %v102, %v575
    %v818 = vadd.f32 %v103, %v580
    %v819 = vadd.f32 %v104, %v585
    %v820 = vadd.f32 %v105, %v590
    %v821 = vadd.f32 %v106, %v595
    %v822 = vadd.f32 %v107, %v600
    %v823 = vadd.f32 %v108, %v605
    %v824 = vadd.f32 %v109, %v610
    %v825 = vadd.f32 %v110, %v615
    %v826 = vadd.f32 %v111, %v620
    %v827 = vadd.f32 %v112, %v625
    %v828 = vadd.f32 %v113, %v630
    %v829 = vadd.f32 %v114, %v635
    %v830 = vadd.f32 %v115, %v640
    %v831 = vadd.f32 %v116, %v645
    %v832 = vadd.f32 %v117, %v650
    %v833 = vadd.f32 %v118, %v655
    %v834 = vadd.f32 %v119, %v660
    %v835 = vadd.f32 %v120, %v665
    %v836 = vadd.f32 %v121, %v670
    %v837 = vadd.f32 %v122, %v675
    %v838 = vadd.f32 %v123, %v680
    %v839 = vadd.f32 %v124, %v685
    %v840 = vadd.f32 %v125, %v690
    %v841 = vadd.f32 %v126, %v695
    %v842 = vadd.f32 %v127, %v700
    %v843 = vadd.f32 %v128, %v705
    %v844 = vadd.f32 %v129, %v710
    %v845 = vadd.f32 %v130, %v715
    %v846 = vadd.f32 %v131, %v720
    %v847 = vadd.f32 %v132, %v725
    %v848 = vadd.f32 %v133, %v730
    %v849 = vadd.f32 %v134, %v735
    %v850 = vadd.f32 %v135, %v740
    %v851 = vadd.f32 %v136, %v745
    %v852 = vadd.f32 %v137, %v750
    %v853 = vadd.f32 %v138, %v755
    %v854 = vadd.f32 %v139, %v760
    %v855 = vadd.f32 %v140, %v765
    %v856 = vadd.f32 %v141, %v770
    %v857 = vadd.f32 %v142, %v775
    %v858 = vadd.f32 %v143, %v780
    %v859 = vadd.f32 %v144, %v785
    %v860 = vadd.f32 %v145, %v790
    %v861 = vadd.f32 %v146, %v795
    %862 = vst [vmem:[#allocation2] sm:$0xff] %v798
    %863 = vst [vmem:[#allocation2 + $0x8] sm:$0xff] %v799
    %864 = vst [vmem:[#allocation2 + $0x10] sm:$0xff] %v800
    %865 = vst [vmem:[#allocation2 + $0x18] sm:$0xff] %v801
    %866 = vst [vmem:[#allocation2 + $0x20] sm:$0xff] %v802
    %867 = vst [vmem:[#allocation2 + $0x28] sm:$0xff] %v803
    %868 = vst [vmem:[#allocation2 + $0x30] sm:$0xff] %v804
    %869 = vst [vmem:[#allocation2 + $0x38] sm:$0xff] %v805
    %870 = vst [vmem:[#allocation2 + $0x40] sm:$0xff] %v806
    %871 = vst [vmem:[#allocation2 + $0x48] sm:$0xff] %v807
    %872 = vst [vmem:[#allocation2 + $0x50] sm:$0xff] %v808
    %873 = vst [vmem:[#allocation2 + $0x58] sm:$0xff] %v809
    %874 = vst [vmem:[#allocation2 + $0x60] sm:$0xff] %v810
    %875 = vst [vmem:[#allocation2 + $0x68] sm:$0xff] %v811
    %876 = vst [vmem:[#allocation2 + $0x70] sm:$0xff] %v812
    %877 = vst [vmem:[#allocation2 + $0x78] sm:$0xff] %v813
    %878 = vst [vmem:[#allocation2 + $0x80] sm:$0xff] %v814
    %879 = vst [vmem:[#allocation2 + $0x88] sm:$0xff] %v815
    %880 = vst [vmem:[#allocation2 + $0x90] sm:$0xff] %v816
    %881 = vst [vmem:[#allocation2 + $0x98] sm:$0xff] %v817
    %882 = vst [vmem:[#allocation2 + $0xa0] sm:$0xff] %v818
    %883 = vst [vmem:[#allocation2 + $0xa8] sm:$0xff] %v819
    %884 = vst [vmem:[#allocation2 + $0xb0] sm:$0xff] %v820
    %885 = vst [vmem:[#allocation2 + $0xb8] sm:$0xff] %v821
    %886 = vst [vmem:[#allocation2 + $0xc0] sm:$0xff] %v822
    %887 = vst [vmem:[#allocation2 + $0xc8] sm:$0xff] %v823
    %888 = vst [vmem:[#allocation2 + $0xd0] sm:$0xff] %v824
    %889 = vst [vmem:[#allocation2 + $0xd8] sm:$0xff] %v825
    %890 = vst [vmem:[#allocation2 + $0xe0] sm:$0xff] %v826
    %891 = vst [vmem:[#allocation2 + $0xe8] sm:$0xff] %v827
    %892 = vst [vmem:[#allocation2 + $0xf0] sm:$0xff] %v828
    %893 = vst [vmem:[#allocation2 + $0xf8] sm:$0xff] %v829
    %894 = vst [vmem:[#allocation2 + $0x100] sm:$0xff] %v830
    %895 = vst [vmem:[#allocation2 + $0x108] sm:$0xff] %v831
    %896 = vst [vmem:[#allocation2 + $0x110] sm:$0xff] %v832
    %897 = vst [vmem:[#allocation2 + $0x118] sm:$0xff] %v833
    %898 = vst [vmem:[#allocation2 + $0x120] sm:$0xff] %v834
    %899 = vst [vmem:[#allocation2 + $0x128] sm:$0xff] %v835
    %900 = vst [vmem:[#allocation2 + $0x130] sm:$0xff] %v836
    %901 = vst [vmem:[#allocation2 + $0x138] sm:$0xff] %v837
    %902 = vst [vmem:[#allocation2 + $0x140] sm:$0xff] %v838
    %903 = vst [vmem:[#allocation2 + $0x148] sm:$0xff] %v839
    %904 = vst [vmem:[#allocation2 + $0x150] sm:$0xff] %v840
    %905 = vst [vmem:[#allocation2 + $0x158] sm:$0xff] %v841
    %906 = vst [vmem:[#allocation2 + $0x160] sm:$0xff] %v842
    %907 = vst [vmem:[#allocation2 + $0x168] sm:$0xff] %v843
    %908 = vst [vmem:[#allocation2 + $0x170] sm:$0xff] %v844
    %909 = vst [vmem:[#allocation2 + $0x178] sm:$0xff] %v845
    %910 = vst [vmem:[#allocation2 + $0x180] sm:$0xff] %v846
    %911 = vst [vmem:[#allocation2 + $0x188] sm:$0xff] %v847
    %912 = vst [vmem:[#allocation2 + $0x190] sm:$0xff] %v848
    %913 = vst [vmem:[#allocation2 + $0x198] sm:$0xff] %v849
    %914 = vst [vmem:[#allocation2 + $0x1a0] sm:$0xff] %v850
    %915 = vst [vmem:[#allocation2 + $0x1a8] sm:$0xff] %v851
    %916 = vst [vmem:[#allocation2 + $0x1b0] sm:$0xff] %v852
    %917 = vst [vmem:[#allocation2 + $0x1b8] sm:$0xff] %v853
    %918 = vst [vmem:[#allocation2 + $0x1c0] sm:$0xff] %v854
    %919 = vst [vmem:[#allocation2 + $0x1c8] sm:$0xff] %v855
    %920 = vst [vmem:[#allocation2 + $0x1d0] sm:$0xff] %v856
    %921 = vst [vmem:[#allocation2 + $0x1d8] sm:$0xff] %v857
    %922 = vst [vmem:[#allocation2 + $0x1e0] sm:$0xff] %v858
    %923 = vst [vmem:[#allocation2 + $0x1e8] sm:$0xff] %v859
    %924 = vst [vmem:[#allocation2 + $0x1f0] sm:$0xff] %v860
    %925 = vst [vmem:[#allocation2 + $0x1f8] sm:$0xff] %v861
    // Predicated region
    $region18: #{tpu_custom_call.1} parent=1 // pred_check
      %p926 = pneg %p15
    $region19: #{tpu_custom_call.1} parent=1 // pred_check_branch
      %928 = sbr.rel (%p926) target = $region21
    $region20: #{tpu_custom_call.1} parent=1 // pred_region
      %v929 = vld [vmem:[#allocation2] sm:$0xff]
      %v930 = vld [vmem:[#allocation2 + $0x8] sm:$0xff]
      %v931 = vld [vmem:[#allocation2 + $0x10] sm:$0xff]
      %v932 = vld [vmem:[#allocation2 + $0x18] sm:$0xff]
      %v933 = vld [vmem:[#allocation2 + $0x20] sm:$0xff]
      %v934 = vld [vmem:[#allocation2 + $0x28] sm:$0xff]
      %v935 = vld [vmem:[#allocation2 + $0x30] sm:$0xff]
      %v936 = vld [vmem:[#allocation2 + $0x38] sm:$0xff]
      %v937 = vld [vmem:[#allocation2 + $0x40] sm:$0xff]
      %v938 = vld [vmem:[#allocation2 + $0x48] sm:$0xff]
      %v939 = vld [vmem:[#allocation2 + $0x50] sm:$0xff]
      %v940 = vld [vmem:[#allocation2 + $0x58] sm:$0xff]
      %v941 = vld [vmem:[#allocation2 + $0x60] sm:$0xff]
      %v942 = vld [vmem:[#allocation2 + $0x68] sm:$0xff]
      %v943 = vld [vmem:[#allocation2 + $0x70] sm:$0xff]
      %v944 = vld [vmem:[#allocation2 + $0x78] sm:$0xff]
      %v945 = vld [vmem:[#allocation2 + $0x80] sm:$0xff]
      %v946 = vld [vmem:[#allocation2 + $0x88] sm:$0xff]
      %v947 = vld [vmem:[#allocation2 + $0x90] sm:$0xff]
      %v948 = vld [vmem:[#allocation2 + $0x98] sm:$0xff]
      %v949 = vld [vmem:[#allocation2 + $0xa0] sm:$0xff]
      %v950 = vld [vmem:[#allocation2 + $0xa8] sm:$0xff]
      %v951 = vld [vmem:[#allocation2 + $0xb0] sm:$0xff]
      %v952 = vld [vmem:[#allocation2 + $0xb8] sm:$0xff]
      %v953 = vld [vmem:[#allocation2 + $0xc0] sm:$0xff]
      %v954 = vld [vmem:[#allocation2 + $0xc8] sm:$0xff]
      %v955 = vld [vmem:[#allocation2 + $0xd0] sm:$0xff]
      %v956 = vld [vmem:[#allocation2 + $0xd8] sm:$0xff]
      %v957 = vld [vmem:[#allocation2 + $0xe0] sm:$0xff]
      %v958 = vld [vmem:[#allocation2 + $0xe8] sm:$0xff]
      %v959 = vld [vmem:[#allocation2 + $0xf0] sm:$0xff]
      %v960 = vld [vmem:[#allocation2 + $0xf8] sm:$0xff]
      %v961 = vld [vmem:[#allocation2 + $0x100] sm:$0xff]
      %v962 = vld [vmem:[#allocation2 + $0x108] sm:$0xff]
      %v963 = vld [vmem:[#allocation2 + $0x110] sm:$0xff]
      %v964 = vld [vmem:[#allocation2 + $0x118] sm:$0xff]
      %v965 = vld [vmem:[#allocation2 + $0x120] sm:$0xff]
      %v966 = vld [vmem:[#allocation2 + $0x128] sm:$0xff]
      %v967 = vld [vmem:[#allocation2 + $0x130] sm:$0xff]
      %v968 = vld [vmem:[#allocation2 + $0x138] sm:$0xff]
      %v969 = vld [vmem:[#allocation2 + $0x140] sm:$0xff]
      %v970 = vld [vmem:[#allocation2 + $0x148] sm:$0xff]
      %v971 = vld [vmem:[#allocation2 + $0x150] sm:$0xff]
      %v972 = vld [vmem:[#allocation2 + $0x158] sm:$0xff]
      %v973 = vld [vmem:[#allocation2 + $0x160] sm:$0xff]
      %v974 = vld [vmem:[#allocation2 + $0x168] sm:$0xff]
      %v975 = vld [vmem:[#allocation2 + $0x170] sm:$0xff]
      %v976 = vld [vmem:[#allocation2 + $0x178] sm:$0xff]
      %v977 = vld [vmem:[#allocation2 + $0x180] sm:$0xff]
      %v978 = vld [vmem:[#allocation2 + $0x188] sm:$0xff]
      %v979 = vld [vmem:[#allocation2 + $0x190] sm:$0xff]
      %v980 = vld [vmem:[#allocation2 + $0x198] sm:$0xff]
      %v981 = vld [vmem:[#allocation2 + $0x1a0] sm:$0xff]
      %v982 = vld [vmem:[#allocation2 + $0x1a8] sm:$0xff]
      %v983 = vld [vmem:[#allocation2 + $0x1b0] sm:$0xff]
      %v984 = vld [vmem:[#allocation2 + $0x1b8] sm:$0xff]
      %v985 = vld [vmem:[#allocation2 + $0x1c0] sm:$0xff]
      %v986 = vld [vmem:[#allocation2 + $0x1c8] sm:$0xff]
      %v987 = vld [vmem:[#allocation2 + $0x1d0] sm:$0xff]
      %v988 = vld [vmem:[#allocation2 + $0x1d8] sm:$0xff]
      %v989 = vld [vmem:[#allocation2 + $0x1e0] sm:$0xff]
      %v990 = vld [vmem:[#allocation2 + $0x1e8] sm:$0xff]
      %v991 = vld [vmem:[#allocation2 + $0x1f0] sm:$0xff]
      %v992 = vld [vmem:[#allocation2 + $0x1f8] sm:$0xff]
      %v993 = vld [vmem:[%s2] sm:$0x1]
      %v995 = vlaneseq
      %v996 = vshrl.u32 %v995, 7
      %v997 = vsub.s32 0, %v996
      %v998 = vrot.slane %v993, %v997
      %v1000 = vadd.f32 %v929, %v998
      %v1001 = vadd.f32 %v930, %v998
      %v1002 = vadd.f32 %v931, %v998
      %v1003 = vadd.f32 %v932, %v998
      %v1004 = vadd.f32 %v933, %v998
      %v1005 = vadd.f32 %v934, %v998
      %v1006 = vadd.f32 %v935, %v998
      %v1007 = vadd.f32 %v936, %v998
      %v1008 = vadd.f32 %v937, %v998
      %v1009 = vadd.f32 %v938, %v998
      %v1010 = vadd.f32 %v939, %v998
      %v1011 = vadd.f32 %v940, %v998
      %v1012 = vadd.f32 %v941, %v998
      %v1013 = vadd.f32 %v942, %v998
      %v1014 = vadd.f32 %v943, %v998
      %v1015 = vadd.f32 %v944, %v998
      %v1016 = vadd.f32 %v945, %v998
      %v1017 = vadd.f32 %v946, %v998
      %v1018 = vadd.f32 %v947, %v998
      %v1019 = vadd.f32 %v948, %v998
      %v1020 = vadd.f32 %v949, %v998
      %v1021 = vadd.f32 %v950, %v998
      %v1022 = vadd.f32 %v951, %v998
      %v1023 = vadd.f32 %v952, %v998
      %v1024 = vadd.f32 %v953, %v998
      %v1025 = vadd.f32 %v954, %v998
      %v1026 = vadd.f32 %v955, %v998
      %v1027 = vadd.f32 %v956, %v998
      %v1028 = vadd.f32 %v957, %v998
      %v1029 = vadd.f32 %v958, %v998
      %v1030 = vadd.f32 %v959, %v998
      %v1031 = vadd.f32 %v960, %v998
      %v1032 = vadd.f32 %v961, %v998
      %v1033 = vadd.f32 %v962, %v998
      %v1034 = vadd.f32 %v963, %v998
      %v1035 = vadd.f32 %v964, %v998
      %v1036 = vadd.f32 %v965, %v998
      %v1037 = vadd.f32 %v966, %v998
      %v1038 = vadd.f32 %v967, %v998
      %v1039 = vadd.f32 %v968, %v998
      %v1040 = vadd.f32 %v969, %v998
      %v1041 = vadd.f32 %v970, %v998
      %v1042 = vadd.f32 %v971, %v998
      %v1043 = vadd.f32 %v972, %v998
      %v1044 = vadd.f32 %v973, %v998
      %v1045 = vadd.f32 %v974, %v998
      %v1046 = vadd.f32 %v975, %v998
      %v1047 = vadd.f32 %v976, %v998
      %v1048 = vadd.f32 %v977, %v998
      %v1049 = vadd.f32 %v978, %v998
      %v1050 = vadd.f32 %v979, %v998
      %v1051 = vadd.f32 %v980, %v998
      %v1052 = vadd.f32 %v981, %v998
      %v1053 = vadd.f32 %v982, %v998
      %v1054 = vadd.f32 %v983, %v998
      %v1055 = vadd.f32 %v984, %v998
      %v1056 = vadd.f32 %v985, %v998
      %v1057 = vadd.f32 %v986, %v998
      %v1058 = vadd.f32 %v987, %v998
      %v1059 = vadd.f32 %v988, %v998
      %v1060 = vadd.f32 %v989, %v998
      %v1061 = vadd.f32 %v990, %v998
      %v1062 = vadd.f32 %v991, %v998
      %v1063 = vadd.f32 %v992, %v998
      %1064 = vst [vmem:[#allocation3] sm:$0xff] %v1000
      %1065 = vst [vmem:[#allocation3 + $0x8] sm:$0xff] %v1001
      %1066 = vst [vmem:[#allocation3 + $0x10] sm:$0xff] %v1002
      %1067 = vst [vmem:[#allocation3 + $0x18] sm:$0xff] %v1003
      %1068 = vst [vmem:[#allocation3 + $0x20] sm:$0xff] %v1004
      %1069 = vst [vmem:[#allocation3 + $0x28] sm:$0xff] %v1005
      %1070 = vst [vmem:[#allocation3 + $0x30] sm:$0xff] %v1006
      %1071 = vst [vmem:[#allocation3 + $0x38] sm:$0xff] %v1007
      %1072 = vst [vmem:[#allocation3 + $0x40] sm:$0xff] %v1008
      %1073 = vst [vmem:[#allocation3 + $0x48] sm:$0xff] %v1009
      %1074 = vst [vmem:[#allocation3 + $0x50] sm:$0xff] %v1010
      %1075 = vst [vmem:[#allocation3 + $0x58] sm:$0xff] %v1011
      %1076 = vst [vmem:[#allocation3 + $0x60] sm:$0xff] %v1012
      %1077 = vst [vmem:[#allocation3 + $0x68] sm:$0xff] %v1013
      %1078 = vst [vmem:[#allocation3 + $0x70] sm:$0xff] %v1014
      %1079 = vst [vmem:[#allocation3 + $0x78] sm:$0xff] %v1015
      %1080 = vst [vmem:[#allocation3 + $0x80] sm:$0xff] %v1016
      %1081 = vst [vmem:[#allocation3 + $0x88] sm:$0xff] %v1017
      %1082 = vst [vmem:[#allocation3 + $0x90] sm:$0xff] %v1018
      %1083 = vst [vmem:[#allocation3 + $0x98] sm:$0xff] %v1019
      %1084 = vst [vmem:[#allocation3 + $0xa0] sm:$0xff] %v1020
      %1085 = vst [vmem:[#allocation3 + $0xa8] sm:$0xff] %v1021
      %1086 = vst [vmem:[#allocation3 + $0xb0] sm:$0xff] %v1022
      %1087 = vst [vmem:[#allocation3 + $0xb8] sm:$0xff] %v1023
      %1088 = vst [vmem:[#allocation3 + $0xc0] sm:$0xff] %v1024
      %1089 = vst [vmem:[#allocation3 + $0xc8] sm:$0xff] %v1025
      %1090 = vst [vmem:[#allocation3 + $0xd0] sm:$0xff] %v1026
      %1091 = vst [vmem:[#allocation3 + $0xd8] sm:$0xff] %v1027
      %1092 = vst [vmem:[#allocation3 + $0xe0] sm:$0xff] %v1028
      %1093 = vst [vmem:[#allocation3 + $0xe8] sm:$0xff] %v1029
      %1094 = vst [vmem:[#allocation3 + $0xf0] sm:$0xff] %v1030
      %1095 = vst [vmem:[#allocation3 + $0xf8] sm:$0xff] %v1031
      %1096 = vst [vmem:[#allocation3 + $0x100] sm:$0xff] %v1032
      %1097 = vst [vmem:[#allocation3 + $0x108] sm:$0xff] %v1033
      %1098 = vst [vmem:[#allocation3 + $0x110] sm:$0xff] %v1034
      %1099 = vst [vmem:[#allocation3 + $0x118] sm:$0xff] %v1035
      %1100 = vst [vmem:[#allocation3 + $0x120] sm:$0xff] %v1036
      %1101 = vst [vmem:[#allocation3 + $0x128] sm:$0xff] %v1037
      %1102 = vst [vmem:[#allocation3 + $0x130] sm:$0xff] %v1038
      %1103 = vst [vmem:[#allocation3 + $0x138] sm:$0xff] %v1039
      %1104 = vst [vmem:[#allocation3 + $0x140] sm:$0xff] %v1040
      %1105 = vst [vmem:[#allocation3 + $0x148] sm:$0xff] %v1041
      %1106 = vst [vmem:[#allocation3 + $0x150] sm:$0xff] %v1042
      %1107 = vst [vmem:[#allocation3 + $0x158] sm:$0xff] %v1043
      %1108 = vst [vmem:[#allocation3 + $0x160] sm:$0xff] %v1044
      %1109 = vst [vmem:[#allocation3 + $0x168] sm:$0xff] %v1045
      %1110 = vst [vmem:[#allocation3 + $0x170] sm:$0xff] %v1046
      %1111 = vst [vmem:[#allocation3 + $0x178] sm:$0xff] %v1047
      %1112 = vst [vmem:[#allocation3 + $0x180] sm:$0xff] %v1048
      %1113 = vst [vmem:[#allocation3 + $0x188] sm:$0xff] %v1049
      %1114 = vst [vmem:[#allocation3 + $0x190] sm:$0xff] %v1050
      %1115 = vst [vmem:[#allocation3 + $0x198] sm:$0xff] %v1051
      %1116 = vst [vmem:[#allocation3 + $0x1a0] sm:$0xff] %v1052
      %1117 = vst [vmem:[#allocation3 + $0x1a8] sm:$0xff] %v1053
      %1118 = vst [vmem:[#allocation3 + $0x1b0] sm:$0xff] %v1054
      %1119 = vst [vmem:[#allocation3 + $0x1b8] sm:$0xff] %v1055
      %1120 = vst [vmem:[#allocation3 + $0x1c0] sm:$0xff] %v1056
      %1121 = vst [vmem:[#allocation3 + $0x1c8] sm:$0xff] %v1057
      %1122 = vst [vmem:[#allocation3 + $0x1d0] sm:$0xff] %v1058
      %1123 = vst [vmem:[#allocation3 + $0x1d8] sm:$0xff] %v1059
      %1124 = vst [vmem:[#allocation3 + $0x1e0] sm:$0xff] %v1060
      %1125 = vst [vmem:[#allocation3 + $0x1e8] sm:$0xff] %v1061
      %1126 = vst [vmem:[#allocation3 + $0x1f0] sm:$0xff] %v1062
      %1127 = vst [vmem:[#allocation3 + $0x1f8] sm:$0xff] %v1063
    $region21: #{tpu_custom_call.1} parent=1 // pred_fallthru
      _
    // Predicated region
    $region22: #{tpu_custom_call.1} parent=1 // pred_check
      _
    $region23: #{tpu_custom_call.1} parent=1 // pred_check_branch
      %1129 = sbr.rel (0) target = $region25
    $region24: #{tpu_custom_call.1} parent=1 // pred_region
      %s1131 = ssub.s32 8192, 8192
      %1132 = vsyncadd [#allocation4], %s1131
      %s1133 = sshll.u32 [#allocation3], 4
      %s1134 = int_to_ptr.vmem [resolvable:$true] %s1133
      %1139 = dma.vmem_to_hbm [thread:$0]  %s1134, 8192, %s3, [#allocation4], 128, 128, 8
    $region25: #{tpu_custom_call.1} parent=1 // pred_fallthru
      _
    // Predicated region
    $region26: #{tpu_custom_call.1} parent=1 // pred_check
      _
    $region27: #{tpu_custom_call.1} parent=1 // pred_check_branch
      %1141 = sbr.rel (0) target = $region29
    $region28: #{tpu_custom_call.1} parent=1 // pred_region
      %1142 = dma.done [#allocation4], 8192
    $region29: #{tpu_custom_call.1} parent=1 // pred_fallthru
      _
    %1143 = vsyncpa [#allocation4], 1

</llo_original>
